<compile_context>
chip_gen: v5e
topology: v5e:2x2
jax: 0.10.0
libtpu: 0.0.40
codegen_flags: <defaults>
</compile_context>

<pallas_src>
import jax
import jax.numpy as jnp
from jax.experimental import pallas as pl
from jax.experimental.pallas import tpu as pltpu


def _mlp_kernel(x_ref, w1t_ref, b1_ref, w2t_ref, b2_ref, o_ref):
    # fc1 + ReLU: (TB, 20) @ (20, 10) -> (TB, 10), f32 accumulation on the MXU.
    h = jnp.dot(x_ref[...], w1t_ref[...], preferred_element_type=jnp.float32)
    h = jnp.maximum(h + b1_ref[...], 0.0)            # (TB,10) + (1,10) bcast
    # fc2 + ReLU: (TB, 10) @ (10, 10) -> (TB, 10)
    y = jnp.dot(h, w2t_ref[...], preferred_element_type=jnp.float32)
    o_ref[...] = jnp.maximum(y + b2_ref[...], 0.0).astype(o_ref.dtype)


def _round_up(v, m):
    return ((v + m - 1) // m) * m


def sample_model_forward(x, w1, b1, w2, b2, *, tb=8192):
    """Pallas forward pass matching PyTorch SampleModel.

    x:  (B, 20) float32
    w1: (10, 20) float32  (PyTorch Linear weight layout: (out, in))
    b1: (10,)    float32
    w2: (10, 10) float32
    b2: (10,)    float32
    returns (B, 10) float32
    """
    B, d_in = x.shape
    d_hid = w1.shape[0]
    d_out = w2.shape[0]

    # ---- batch-tile selection --------------------------------------------
    # Multiple of 128, capped at 16384 (lane-padded VMEM buffers; see header).
    tb = max(128, min((int(tb) // 128) * 128, 16384))
    if B > tb:
        TB = tb
    elif B >= 1024:
        # Big-but-single-tile batch: split into >=2 tiles so the "parallel"
        # grid axis can be sharded across v7x's two TensorCores.
        TB = min(tb, _round_up((B + 1) // 2, 128))
    else:
        TB = B                                        # one full block
    grid = pl.cdiv(B, TB)                             # partial last block OK

    # Tiny one-time weight reshapes (<= 800 B each); activations are untouched.
    w1t = jnp.transpose(w1)                           # (20, 10)
    w2t = jnp.transpose(w2)                           # (10, 10)
    b1_r = b1.reshape(1, d_hid)                       # (1, 10)
    b2_r = b2.reshape(1, d_out)                       # (1, 10)

    # x + out tiles, double-buffered, lane-padded 20/10 -> 128, + margin.
    vmem_needed = 4 * _round_up(TB, 8) * 128 * 4 + (2 << 20)
    vmem_limit = min(max(vmem_needed, 20 << 20), 48 << 20)

    out = pl.pallas_call(
        _mlp_kernel,
        out_shape=jax.ShapeDtypeStruct((B, d_out), jnp.float32),
        grid=(grid,),
        in_specs=[
            pl.BlockSpec((TB, d_in), lambda i: (i, 0)),      # x tile (streams)
            pl.BlockSpec((d_in, d_hid), lambda i: (0, 0)),   # w1.T (resident)
            pl.BlockSpec((1, d_hid), lambda i: (0, 0)),      # b1   (resident)
            pl.BlockSpec((d_hid, d_out), lambda i: (0, 0)),  # w2.T (resident)
            pl.BlockSpec((1, d_out), lambda i: (0, 0)),      # b2   (resident)
        ],
        out_specs=pl.BlockSpec((TB, d_out), lambda i: (i, 0)),
        compiler_params=pltpu.CompilerParams(
            dimension_semantics=("parallel",),
            vmem_limit_bytes=vmem_limit,
        ),
    )(x, w1t, b1_r, w2t, b2_r)
    return out


def _reference_forward(x, w1, b1, w2, b2):
    h = jnp.maximum(x @ w1.T + b1, 0.0)
    return jnp.maximum(h @ w2.T + b2, 0.0)


if __name__ == "__main__":
    key = jax.random.PRNGKey(0)
    kx, k1, k2, k3, k4, kx2 = jax.random.split(key, 6)

    B, D_IN, D_HID, D_OUT = 8, 20, 10, 10
    x = jax.random.normal(kx, (B, D_IN), dtype=jnp.float32)

    # Deterministic synthetic parameters (PyTorch-like uniform init scale).
    bound1 = 1.0 / (D_IN ** 0.5)
    bound2 = 1.0 / (D_HID ** 0.5)
    w1 = jax.random.uniform(k1, (D_HID, D_IN), minval=-bound1, maxval=bound1,
                            dtype=jnp.float32)
    b1 = jax.random.uniform(k2, (D_HID,), minval=-bound1, maxval=bound1,
                            dtype=jnp.float32)
    w2 = jax.random.uniform(k3, (D_OUT, D_HID), minval=-bound2, maxval=bound2,
                            dtype=jnp.float32)
    b2 = jax.random.uniform(k4, (D_OUT,), minval=-bound2, maxval=bound2,
                            dtype=jnp.float32)

    # Small-batch path (single full block).
    out = sample_model_forward(x, w1, b1, w2, b2)
    jax.block_until_ready(out)
    ref = _reference_forward(x, w1, b1, w2, b2)
    assert out.shape == (B, D_OUT)
    assert jnp.allclose(out, ref, atol=1e-5, rtol=1e-5)

    # Gridded path with a partial last block (no explicit padding anywhere).
    B2 = 200
    x2 = jax.random.normal(kx2, (B2, D_IN), dtype=jnp.float32)
    out2 = sample_model_forward(x2, w1, b1, w2, b2, tb=128)
    jax.block_until_ready(out2)
    ref2 = _reference_forward(x2, w1, b1, w2, b2)
    assert out2.shape == (B2, D_OUT)
    assert jnp.allclose(out2, ref2, atol=1e-5, rtol=1e-5)

    print("KERNEL_OK")
</pallas_src>

<mosaic_0001>
module attributes {stable_mosaic.version = 11 : i64} {
  func.func @_mlp_kernel(%arg0: i32, %arg1: memref<8x20xf32, #tpu.memory_space<vmem>>, %arg2: memref<20x10xf32, #tpu.memory_space<vmem>>, %arg3: memref<1x10xf32, #tpu.memory_space<vmem>>, %arg4: memref<10x10xf32, #tpu.memory_space<vmem>>, %arg5: memref<1x10xf32, #tpu.memory_space<vmem>>, %arg6: memref<8x10xf32, #tpu.memory_space<vmem>>) attributes {dimension_semantics = [#tpu.dimension_semantics<parallel>], iteration_bounds = array<i64: 1>, scalar_prefetch = 0 : i64, scratch_operands = 0 : i64, tpu.core_type = #tpu.core_type<tc>, window_params = [{transform_indices = @transform_0, window_bounds = array<i64: 8, 20>}, {pipeline_mode = #tpu.pipeline_mode<synchronous>, transform_indices = @transform_1, window_bounds = array<i64: 20, 10>}, {pipeline_mode = #tpu.pipeline_mode<synchronous>, transform_indices = @transform_2, window_bounds = array<i64: 1, 10>}, {pipeline_mode = #tpu.pipeline_mode<synchronous>, transform_indices = @transform_3, window_bounds = array<i64: 10, 10>}, {pipeline_mode = #tpu.pipeline_mode<synchronous>, transform_indices = @transform_4, window_bounds = array<i64: 1, 10>}, {transform_indices = @transform_5, window_bounds = array<i64: 8, 10>}]} {
    %c0 = arith.constant 0 : index
    %c0_0 = arith.constant 0 : index
    %0 = vector.load %arg1[%c0, %c0_0] : memref<8x20xf32, #tpu.memory_space<vmem>>, vector<8x20xf32>
    %c0_1 = arith.constant 0 : index
    %c0_2 = arith.constant 0 : index
    %1 = vector.load %arg2[%c0_1, %c0_2] : memref<20x10xf32, #tpu.memory_space<vmem>>, vector<20x10xf32>
    %cst = arith.constant dense<0.000000e+00> : vector<8x10xf32>
    %2 = tpu.matmul %0, %1, %cst {dimension_numbers = #tpu.dot_dimension_numbers<[1], [0], [0], [1], [0, 0, 1, 1], [], []>} : vector<8x20xf32>, vector<20x10xf32>, vector<8x10xf32> -> vector<8x10xf32>
    %c0_3 = arith.constant 0 : index
    %c0_4 = arith.constant 0 : index
    %3 = vector.load %arg3[%c0_3, %c0_4] : memref<1x10xf32, #tpu.memory_space<vmem>>, vector<1x10xf32>
    %4 = vector.broadcast %3 : vector<1x10xf32> to vector<8x10xf32>
    %5 = arith.addf %2, %4 : vector<8x10xf32>
    %cst_5 = arith.constant 0.000000e+00 : f32
    %6 = vector.broadcast %cst_5 : f32 to vector<8x10xf32>
    %7 = arith.maximumf %5, %6 : vector<8x10xf32>
    %c0_6 = arith.constant 0 : index
    %c0_7 = arith.constant 0 : index
    %8 = vector.load %arg4[%c0_6, %c0_7] : memref<10x10xf32, #tpu.memory_space<vmem>>, vector<10x10xf32>
    %cst_8 = arith.constant dense<0.000000e+00> : vector<8x10xf32>
    %9 = tpu.matmul %7, %8, %cst_8 {dimension_numbers = #tpu.dot_dimension_numbers<[1], [0], [0], [1], [0, 0, 1, 1], [], []>} : vector<8x10xf32>, vector<10x10xf32>, vector<8x10xf32> -> vector<8x10xf32>
    %c0_9 = arith.constant 0 : index
    %c0_10 = arith.constant 0 : index
    %10 = vector.load %arg5[%c0_9, %c0_10] : memref<1x10xf32, #tpu.memory_space<vmem>>, vector<1x10xf32>
    %11 = vector.broadcast %10 : vector<1x10xf32> to vector<8x10xf32>
    %12 = arith.addf %9, %11 : vector<8x10xf32>
    %cst_11 = arith.constant 0.000000e+00 : f32
    %13 = vector.broadcast %cst_11 : f32 to vector<8x10xf32>
    %14 = arith.maximumf %12, %13 : vector<8x10xf32>
    %c0_12 = arith.constant 0 : index
    %c0_13 = arith.constant 0 : index
    %15 = vector.load %arg6[%c0_12, %c0_13] : memref<8x10xf32, #tpu.memory_space<vmem>>, vector<8x10xf32>
    tpu.vector_store %arg6[%c0_12, %c0_13], %14 {strides = array<i32>} : memref<8x10xf32, #tpu.memory_space<vmem>>, vector<8x10xf32>,
    return
  }
  func.func @transform_0(%arg0: i32) -> (i32, i32) {
    %c0_i32 = arith.constant 0 : i32
    %c0_i32_0 = arith.constant 0 : i32
    return %arg0, %c0_i32 : i32, i32
  }
  func.func @transform_1(%arg0: i32) -> (i32, i32) {
    %c0_i32 = arith.constant 0 : i32
    %c0_i32_0 = arith.constant 0 : i32
    %c0_i32_1 = arith.constant 0 : i32
    return %c0_i32, %c0_i32_0 : i32, i32
  }
  func.func @transform_2(%arg0: i32) -> (i32, i32) {
    %c0_i32 = arith.constant 0 : i32
    %c0_i32_0 = arith.constant 0 : i32
    %c0_i32_1 = arith.constant 0 : i32
    return %c0_i32, %c0_i32_0 : i32, i32
  }
  func.func @transform_3(%arg0: i32) -> (i32, i32) {
    %c0_i32 = arith.constant 0 : i32
    %c0_i32_0 = arith.constant 0 : i32
    %c0_i32_1 = arith.constant 0 : i32
    return %c0_i32, %c0_i32_0 : i32, i32
  }
  func.func @transform_4(%arg0: i32) -> (i32, i32) {
    %c0_i32 = arith.constant 0 : i32
    %c0_i32_0 = arith.constant 0 : i32
    %c0_i32_1 = arith.constant 0 : i32
    return %c0_i32, %c0_i32_0 : i32, i32
  }
  func.func @transform_5(%arg0: i32) -> (i32, i32) {
    %c0_i32 = arith.constant 0 : i32
    %c0_i32_0 = arith.constant 0 : i32
    return %arg0, %c0_i32 : i32, i32
  }
}

</mosaic_0001>

<llo_original>
// kernel: tpu_custom_call.1
$region0: #{tpu_custom_call.1}
  #allocation0 [shape = 'u32[]', space=smem, size = 0x4, offset = 0x4, fixed_abs, tag = 'smem constant byte address 0x4 - core index']
  #allocation1 [shape = 'u32[72,128]{1,0:T(1,128)}', space=vmem, size = 0x9000, scoped, tag = 'internal scratch']
  %s0 = inlined_call_operand.vmem [shape: f32[8,20], index: 0, kind: input, shape index: {}]
  %s1 = inlined_call_operand.vmem [shape: f32[20,10], index: 1, kind: input, shape index: {}]
  %s2 = inlined_call_operand.vmem [shape: f32[1,10], index: 2, kind: input, shape index: {}]
  %s3 = inlined_call_operand.vmem [shape: f32[10,10], index: 3, kind: input, shape index: {}]
  %s4 = inlined_call_operand.vmem [shape: f32[1,10], index: 4, kind: input, shape index: {}]
  %s5 = inlined_call_operand.hbm [shape: f32[8,10], index: 5, kind: output, shape index: {}]
  %s6 = sld [smem:[#allocation0]]
  $region30: #{tpu_custom_call.1} parent=0
    _
  %s8 = ssub.s32 1, %s6
  %s9 = scalar_select 0, %s8, %s6
  $region1: #{tpu_custom_call.1} parent=0
    #allocation2 [shape = 'u8[4096]{0}', space=vmem, size = 0x1000, scoped, tag = 'output window, operand 0, single buffered']
    #allocation3 [shape = 's32[1]{0}', space=sflag, size = 0x4, scoped, tag = 'scoped memory for tpu_custom_call.1']
    %10 = vsyncpa [#allocation3], 0
    // Predicated region
    $region2: #{tpu_custom_call.1} parent=1 // pred_check
      _
    $region3: #{tpu_custom_call.1} parent=1 // pred_check_branch
      %12 = sbr.rel (0) target = $region5
    $region4: #{tpu_custom_call.1} parent=1 // pred_region
      _
    $region5: #{tpu_custom_call.1} parent=1 // pred_fallthru
      _
    // Predicated region
    $region6: #{tpu_custom_call.1} parent=1 // pred_check
      _
    $region7: #{tpu_custom_call.1} parent=1 // pred_check_branch
      %14 = sbr.rel (0) target = $region9
    $region8: #{tpu_custom_call.1} parent=1 // pred_region
      _
    $region9: #{tpu_custom_call.1} parent=1 // pred_fallthru
      _
    // Predicated region
    $region10: #{tpu_custom_call.1} parent=1 // pred_check
      _
    $region11: #{tpu_custom_call.1} parent=1 // pred_check_branch
      %16 = sbr.rel (0) target = $region13
    $region12: #{tpu_custom_call.1} parent=1 // pred_region
      _
    $region13: #{tpu_custom_call.1} parent=1 // pred_fallthru
      _
    // Predicated region
    $region14: #{tpu_custom_call.1} parent=1 // pred_check
      _
    $region15: #{tpu_custom_call.1} parent=1 // pred_check_branch
      %18 = sbr.rel (0) target = $region17
    $region16: #{tpu_custom_call.1} parent=1 // pred_region
      _
    $region17: #{tpu_custom_call.1} parent=1 // pred_fallthru
      _
    // Predicated region
    $region18: #{tpu_custom_call.1} parent=1 // pred_check
      _
    $region19: #{tpu_custom_call.1} parent=1 // pred_check_branch
      %20 = sbr.rel (0) target = $region21
    $region20: #{tpu_custom_call.1} parent=1 // pred_region
      _
    $region21: #{tpu_custom_call.1} parent=1 // pred_fallthru
      _
    %v21 = vld [vmem:[%s0] sm:$0xff]
    %v22 = vld [vmem:[%s1] sm:$0xff]
    %v23 = vld [vmem:[%s1 + $0x8] sm:$0xff]
    %v24 = vld [vmem:[%s1 + $0x10] sm:$0xf]
    %v25 = vld [vmem:[%s2] sm:$0x1]
    %v27 = vperm.slane %v25, 0
    %vm29 = vcmask 162816
    %v31 = vsel %vm29, %v21, 0
    %vm33 = vcmask 1043456
    %v35 = vsel %vm33, %v24, 0
    %37 = vmatpush.msra.mxu0 0.0
    %38 = vmatpush.msra.mxu0 0.0
    %39 = vmatpush.msra.mxu0 0.0
    %40 = vmatpush.msra.mxu0 0.0
    %41 = vmatpush.msra.mxu0 0.0
    %42 = vmatpush.msra.mxu0 0.0
    %43 = vmatpush.msra.mxu0 0.0
    %44 = vmatpush.msra.mxu0 0.0
    %45 = vmatpush.msra.mxu0 0.0
    %46 = vmatpush.msra.mxu0 0.0
    %47 = vmatpush.msra.mxu0 0.0
    %48 = vmatpush.msra.mxu0 0.0
    %49 = vmatpush.msra.mxu0 0.0
    %50 = vmatpush.msra.mxu0 %v35
    %51 = vmatpush.msra.mxu0 %v23
    %52 = vmatpush.msra.mxu0 %v22
    %53 = vmatmul.f32.gmra.mxu0 %v31
    %v54 = vpop.f32.mrf.mxu0
    %v55 = vadd.f32 %v27, %v54
    %56 = vdwg.mxu0
    %v57 = vmax.f32 %v55, 0.0
    %v58 = vld [vmem:[%s3] sm:$0xff]
    %v59 = vld [vmem:[%s3 + $0x8] sm:$0x3]
    %v60 = vld [vmem:[%s4] sm:$0x1]
    %v62 = vperm.slane %v60, 0
    %vm64 = vcmask 80896
    %v66 = vsel %vm64, %v57, 0
    %vm68 = vcmask 1041408
    %v70 = vsel %vm68, %v59, 0
    %72 = vmatpush.msra.mxu0 0.0
    %73 = vmatpush.msra.mxu0 0.0
    %74 = vmatpush.msra.mxu0 0.0
    %75 = vmatpush.msra.mxu0 0.0
    %76 = vmatpush.msra.mxu0 0.0
    %77 = vmatpush.msra.mxu0 0.0
    %78 = vmatpush.msra.mxu0 0.0
    %79 = vmatpush.msra.mxu0 0.0
    %80 = vmatpush.msra.mxu0 0.0
    %81 = vmatpush.msra.mxu0 0.0
    %82 = vmatpush.msra.mxu0 0.0
    %83 = vmatpush.msra.mxu0 0.0
    %84 = vmatpush.msra.mxu0 0.0
    %85 = vmatpush.msra.mxu0 0.0
    %86 = vmatpush.msra.mxu0 %v70
    %87 = vmatpush.msra.mxu0 %v58
    %88 = vmatmul.f32.gmra.mxu0 %v66
    %v89 = vpop.f32.mrf.mxu0
    %v90 = vadd.f32 %v62, %v89
    %91 = vdwg.mxu0
    %v92 = vmax.f32 %v90, 0.0
    %93 = vst.msk [vmem:[#allocation2] sm:$0xff] %vm64, %v92
    // Predicated region
    $region22: #{tpu_custom_call.1} parent=1 // pred_check
      _
    $region23: #{tpu_custom_call.1} parent=1 // pred_check_branch
      %95 = sbr.rel (0) target = $region25
    $region24: #{tpu_custom_call.1} parent=1 // pred_region
      %97 = vsyncadd [#allocation3], 0
      %s99 = sshll.u32 [#allocation2], 4
      %s100 = int_to_ptr.vmem [resolvable:$true] %s99
      %s101 = sshll.u32 %s5, 4
      %s102 = int_to_ptr.hbm [resolvable:$true] %s101
      %104 = dma.vmem_to_hbm [thread:$0]  %s100, 128, %s102, [#allocation3]
    $region25: #{tpu_custom_call.1} parent=1 // pred_fallthru
      _
    // Predicated region
    $region26: #{tpu_custom_call.1} parent=1 // pred_check
      _
    $region27: #{tpu_custom_call.1} parent=1 // pred_check_branch
      %106 = sbr.rel (0) target = $region29
    $region28: #{tpu_custom_call.1} parent=1 // pred_region
      %108 = dma.done [#allocation3], 128
    $region29: #{tpu_custom_call.1} parent=1 // pred_fallthru
      _
    %109 = vsyncpa [#allocation3], 1

</llo_original>
